<compile_context>
chip_gen: v6e
topology: v6e:2x2x1
jax: 0.10.0
libtpu: 0.0.40
codegen_flags: <defaults>
</compile_context>

<pallas_src>
import functools

import jax
import jax.numpy as jnp
from jax.experimental import pallas as pl
from jax.experimental.pallas import tpu as pltpu

LANES = 128      # lane width of the box axis
MAX_ROWS = 512   # sublane rows per grid step -> up to 512*128 = 65536 boxes/step


def _cdiv(a, b):
    return -(-a // b)


def _round_up(x, m):
    return _cdiv(x, m) * m


def _tiling(n, sub, max_rows=MAX_ROWS):
    """Return (rows_pad, block_rows, num_blocks) for n boxes.

    sub = sublane granularity (8 for 4-byte dtypes, 16 for 2-byte).
    """
    rows = _cdiv(n, LANES)
    if rows <= 2 * sub:
        # Tiny problem: one full-extent block (no divisibility requirement).
        return rows, rows, 1
    num_blocks = max(2, _cdiv(rows, max_rows))
    if num_blocks % 2:
        num_blocks += 1  # even block count -> balanced across v7x's two TCs
    block_rows = min(_round_up(max_rows, sub),
                     _round_up(_cdiv(rows, num_blocks), sub))
    num_blocks = _cdiv(rows, block_rows)
    return num_blocks * block_rows, block_rows, num_blocks


def _giou_planes(pred_ref, tgt_ref, eps):
    """Per-box GIoU loss (unweighted). Refs are (4, R, 128); returns (R, 128) f32."""
    f32 = jnp.float32
    px1, py1, px2, py2 = (pred_ref[c].astype(f32) for c in range(4))
    tx1, ty1, tx2, ty2 = (tgt_ref[c].astype(f32) for c in range(4))

    # intersection -- matches the reference: torch.abs(rb - lt).clamp(min=0)
    lt_x = jnp.maximum(px1, tx1)
    lt_y = jnp.maximum(py1, ty1)
    rb_x = jnp.minimum(px2, tx2)
    rb_y = jnp.minimum(py2, ty2)
    wh_x = jnp.abs(rb_x - lt_x)   # abs is already >= 0; clamp(min=0) is redundant
    wh_y = jnp.abs(rb_y - lt_y)
    overlap = wh_x * wh_y

    # union
    ap = (px2 - px1) * (py2 - py1)
    ag = (tx2 - tx1) * (ty2 - ty1)
    union = ap + ag - overlap + eps
    ious = overlap / union

    # smallest enclosing box
    ex1 = jnp.minimum(px1, tx1)
    ey1 = jnp.minimum(py1, ty1)
    ex2 = jnp.maximum(px2, tx2)
    ey2 = jnp.maximum(py2, ty2)
    ew = jnp.maximum(ex2 - ex1, 0.0)
    eh = jnp.maximum(ey2 - ey1, 0.0)
    enclose_area = ew * eh + eps

    gious = ious - (enclose_area - union) / enclose_area
    return 1.0 - gious


def _none_kernel(eps, has_weight, *refs):
    """Elementwise variant: last ref is a dense (R, 128) output block."""
    if has_weight:
        pred_ref, tgt_ref, w_ref, out_ref = refs
    else:
        pred_ref, tgt_ref, out_ref = refs
    loss = _giou_planes(pred_ref, tgt_ref, eps)
    if has_weight:
        loss = loss * w_ref[...]
    out_ref[...] = loss


def _sum_kernel(eps, n, block_rows, has_weight, *refs):
    """Sum variant: write an (8, 128) per-block partial; no per-box output."""
    if has_weight:
        pred_ref, tgt_ref, w_ref, psum_ref = refs
    else:
        pred_ref, tgt_ref, psum_ref = refs
    loss = _giou_planes(pred_ref, tgt_ref, eps)
    if has_weight:
        # zero-padded weights mask the tail, no extra work needed
        loss = loss * w_ref[...]
    else:
        # padded all-zero boxes would contribute loss == 1.0 each -> mask them
        row = jax.lax.broadcasted_iota(jnp.int32, loss.shape, 0)
        lane = jax.lax.broadcasted_iota(jnp.int32, loss.shape, 1)
        idx = (pl.program_id(0) * block_rows + row) * LANES + lane
        loss = jnp.where(idx < n, loss, 0.0)

    # reduce (block_rows, 128) -> (8, 128): pure vreg adds on the VPU
    if block_rows % 8 == 0:
        partial = loss.reshape(block_rows // 8, 8, LANES).sum(axis=0)
    else:  # tiny single-block case
        partial = jnp.concatenate(
            [jnp.sum(loss, axis=0, keepdims=True),
             jnp.zeros((7, LANES), jnp.float32)], axis=0)
    psum_ref[...] = partial


def giou_loss_pallas(pred, target, weight=None, *, eps=1e-6, reduction="mean",
                     avg_factor=None, loss_weight=1.0, reduction_override=None):
    """Matches GIoULoss(eps, reduction, loss_weight).forward(pred, target, weight, avg_factor)."""
    assert reduction_override in (None, "none", "mean", "sum")
    reduction = reduction_override if reduction_override else reduction
    assert reduction in ("none", "mean", "sum")
    if reduction == "sum" and avg_factor is not None:
        raise ValueError('avg_factor can not be used with reduction="sum"')

    # TODO(synk): torch's data-dependent early return
    #   `if weight is not None and not (weight > 0).any(): return (pred * weight).sum()`
    # is a value-dependent Python branch; not reproduced here (the returned value
    # coincides with 0.0 for sum/mean anyway).

    n = pred.shape[0]
    f32 = jnp.float32

    has_weight = weight is not None
    if has_weight:
        w = weight.astype(f32)
        if w.ndim > 1:
            assert w.shape == tuple(pred.shape)
            w = w.mean(-1)

    if n == 0:
        if reduction == "none":
            return jnp.zeros((0,), f32)
        if reduction == "sum":
            return loss_weight * jnp.float32(0.0)
        denom = jnp.asarray(avg_factor, f32) if avg_factor is not None else jnp.float32(0.0)
        return loss_weight * (jnp.float32(0.0) / denom)  # mean of empty -> nan, like torch

    # keep bf16/f16 narrow through the DMA, cast to f32 inside the kernel
    if pred.dtype == target.dtype and pred.dtype in (jnp.float32, jnp.bfloat16, jnp.float16):
        box_dtype = pred.dtype
    else:
        box_dtype = f32
    sub = 8 if jnp.dtype(box_dtype).itemsize == 4 else 16

    rows_pad, block_rows, num_blocks = _tiling(n, sub)
    n_pad = rows_pad * LANES

    # Lane/sublane-dense SoA layout: box i -> (row i // 128, lane i % 128).
    pred_l = jnp.pad(pred.astype(box_dtype), ((0, n_pad - n), (0, 0))).T.reshape(4, rows_pad, LANES)
    tgt_l = jnp.pad(target.astype(box_dtype), ((0, n_pad - n), (0, 0))).T.reshape(4, rows_pad, LANES)

    box_spec = pl.BlockSpec((4, block_rows, LANES), lambda i: (0, i, 0))
    in_specs = [box_spec, box_spec]
    operands = [pred_l, tgt_l]
    if has_weight:
        w_l = jnp.pad(w, (0, n_pad - n)).reshape(rows_pad, LANES)  # zero pad masks the tail
        in_specs.append(pl.BlockSpec((block_rows, LANES), lambda i: (i, 0)))
        operands.append(w_l)

    cparams = pltpu.CompilerParams(
        dimension_semantics=("parallel",),
        vmem_limit_bytes=32 * 1024 * 1024,
    )

    if reduction == "none":
        loss_el = pl.pallas_call(
            functools.partial(_none_kernel, float(eps), has_weight),
            out_shape=jax.ShapeDtypeStruct((rows_pad, LANES), f32),
            grid_spec=pltpu.PrefetchScalarGridSpec(
                num_scalar_prefetch=0,
                grid=(num_blocks,),
                in_specs=in_specs,
                out_specs=pl.BlockSpec((block_rows, LANES), lambda i: (i, 0)),
            ),
            compiler_params=cparams,
        )(*operands)
        return loss_weight * loss_el.reshape(-1)[:n]

    # 'mean' / 'sum': sum-only kernel (no per-box HBM writeback); per-block
    # (8, 128) partials reduced by a tiny jnp.sum outside the kernel.
    psum = pl.pallas_call(
        functools.partial(_sum_kernel, float(eps), int(n), int(block_rows), has_weight),
        out_shape=jax.ShapeDtypeStruct((num_blocks * 8, LANES), f32),
        grid_spec=pltpu.PrefetchScalarGridSpec(
            num_scalar_prefetch=0,
            grid=(num_blocks,),
            in_specs=in_specs,
            out_specs=pl.BlockSpec((8, LANES), lambda i: (i, 0)),
        ),
        compiler_params=cparams,
    )(*operands)
    total = jnp.sum(psum)

    if reduction == "sum":
        return loss_weight * total
    denom = jnp.float32(n) if avg_factor is None else jnp.asarray(avg_factor, f32)
    return loss_weight * (total / denom)


# ----------------------------- reference & tests -----------------------------

def _giou_loss_ref(pred, target, eps):
    """Pure-JAX replica of the torch giou_loss (reduction='none', unweighted)."""
    pred = pred.astype(jnp.float32)
    target = target.astype(jnp.float32)
    lt = jnp.maximum(pred[:, :2], target[:, :2])
    rb = jnp.minimum(pred[:, 2:], target[:, 2:])
    wh = jnp.maximum(jnp.abs(rb - lt), 0.0)
    overlap = wh[:, 0] * wh[:, 1]
    ap = (pred[:, 2] - pred[:, 0]) * (pred[:, 3] - pred[:, 1])
    ag = (target[:, 2] - target[:, 0]) * (target[:, 3] - target[:, 1])
    union = ap + ag - overlap + eps
    ious = overlap / union
    exy1 = jnp.minimum(pred[:, :2], target[:, :2])
    exy2 = jnp.maximum(pred[:, 2:], target[:, 2:])
    ewh = jnp.maximum(exy2 - exy1, 0.0)
    earea = ewh[:, 0] * ewh[:, 1] + eps
    gious = ious - (earea - union) / earea
    return 1.0 - gious


def _make_boxes(key, n):
    k1, k2 = jax.random.split(key)
    xy1 = jax.random.uniform(k1, (n, 2), jnp.float32, 0.0, 10.0)
    wh = jax.random.uniform(k2, (n, 2), jnp.float32, 1.0, 5.0)
    return jnp.concatenate([xy1, xy1 + wh], axis=-1)


if __name__ == "__main__":
    key = jax.random.PRNGKey(0)
    kp1, kt1, kp2, kt2, kw2, kp3, kt3, kw3 = jax.random.split(key, 8)

    # tolerance sized for f32 with backend-dependent division precision
    TOL = dict(atol=5e-3, rtol=5e-3)

    # --- small case: n = 8 boxes (n, 4), no weight ---
    n1 = 8
    pred1 = _make_boxes(kp1, n1)
    tgt1 = _make_boxes(kt1, n1)
    ref1 = _giou_loss_ref(pred1, tgt1, 1e-6)

    out = jax.block_until_ready(giou_loss_pallas(pred1, tgt1, eps=1e-6, reduction="mean"))
    assert jnp.allclose(out, ref1.mean(), **TOL), (out, ref1.mean())

    out = jax.block_until_ready(giou_loss_pallas(pred1, tgt1, eps=1e-6, reduction="sum"))
    assert jnp.allclose(out, ref1.sum(), **TOL), (out, ref1.sum())

    out = jax.block_until_ready(giou_loss_pallas(pred1, tgt1, eps=1e-6, reduction="none"))
    assert jnp.allclose(out, ref1, **TOL)

    # --- multi-block case (grid of 2), (n, 4) weights ---
    n2 = 2500
    pred2 = _make_boxes(kp2, n2)
    tgt2 = _make_boxes(kt2, n2)
    w2 = jax.random.uniform(kw2, (n2, 4), jnp.float32, 0.0, 1.0)
    ref2 = _giou_loss_ref(pred2, tgt2, 1e-6) * w2.mean(-1)

    out = jax.block_until_ready(giou_loss_pallas(pred2, tgt2, w2, eps=1e-6, reduction="sum"))
    assert jnp.allclose(out, ref2.sum(), **TOL), (out, ref2.sum())

    out = jax.block_until_ready(
        giou_loss_pallas(pred2, tgt2, w2, eps=1e-6, reduction="mean",
                         avg_factor=777.0, loss_weight=2.0))
    assert jnp.allclose(out, 2.0 * ref2.sum() / 777.0, **TOL)

    out = jax.block_until_ready(giou_loss_pallas(pred2, tgt2, w2, eps=1e-6, reduction="none"))
    assert jnp.allclose(out, ref2, **TOL)

    # multi-block, no weight (exercises the in-kernel padded-tail mask)
    ref2u = _giou_loss_ref(pred2, tgt2, 1e-6)
    out = jax.block_until_ready(giou_loss_pallas(pred2, tgt2, eps=1e-6, reduction="mean"))
    assert jnp.allclose(out, ref2u.mean(), **TOL), (out, ref2u.mean())

    # --- bf16 boxes (DMA'd narrow, cast in-kernel) with a 1-D weight ---
    n3 = 200
    pred3 = _make_boxes(kp3, n3).astype(jnp.bfloat16)
    tgt3 = _make_boxes(kt3, n3).astype(jnp.bfloat16)
    w3 = jax.random.uniform(kw3, (n3,), jnp.float32, 0.0, 1.0)
    ref3 = _giou_loss_ref(pred3, tgt3, 1e-6) * w3
    out = jax.block_until_ready(giou_loss_pallas(pred3, tgt3, w3, eps=1e-6, reduction="sum"))
    assert jnp.allclose(out, ref3.sum(), **TOL), (out, ref3.sum())

    print("KERNEL_OK")
</pallas_src>

<mosaic_0001>
module attributes {stable_mosaic.version = 11 : i64} {
  func.func @_sum_kernel(%arg0: i32, %arg1: memref<4x1x128xf32, #tpu.memory_space<vmem>>, %arg2: memref<4x1x128xf32, #tpu.memory_space<vmem>>, %arg3: memref<8x128xf32, #tpu.memory_space<vmem>>) attributes {dimension_semantics = [#tpu.dimension_semantics<parallel>], iteration_bounds = array<i64: 1>, scalar_prefetch = 0 : i64, scratch_operands = 0 : i64, tpu.core_type = #tpu.core_type<tc>, window_params = [{transform_indices = @transform_0, window_bounds = array<i64: 4, 1, 128>}, {transform_indices = @transform_1, window_bounds = array<i64: 4, 1, 128>}, {transform_indices = @transform_2, window_bounds = array<i64: 8, 128>}]} {
    %c0 = arith.constant 0 : index
    %c0_0 = arith.constant 0 : index
    %c0_1 = arith.constant 0 : index
    %0 = vector.load %arg1[%c0, %c0_0, %c0_1] : memref<4x1x128xf32, #tpu.memory_space<vmem>>, vector<1x1x128xf32>
    %1 = vector.shape_cast %0 : vector<1x1x128xf32> to vector<1x128xf32>
    %c1 = arith.constant 1 : index
    %c0_2 = arith.constant 0 : index
    %c0_3 = arith.constant 0 : index
    %2 = vector.load %arg1[%c1, %c0_2, %c0_3] : memref<4x1x128xf32, #tpu.memory_space<vmem>>, vector<1x1x128xf32>
    %3 = vector.shape_cast %2 : vector<1x1x128xf32> to vector<1x128xf32>
    %c2 = arith.constant 2 : index
    %c0_4 = arith.constant 0 : index
    %c0_5 = arith.constant 0 : index
    %4 = vector.load %arg1[%c2, %c0_4, %c0_5] : memref<4x1x128xf32, #tpu.memory_space<vmem>>, vector<1x1x128xf32>
    %5 = vector.shape_cast %4 : vector<1x1x128xf32> to vector<1x128xf32>
    %c3 = arith.constant 3 : index
    %c0_6 = arith.constant 0 : index
    %c0_7 = arith.constant 0 : index
    %6 = vector.load %arg1[%c3, %c0_6, %c0_7] : memref<4x1x128xf32, #tpu.memory_space<vmem>>, vector<1x1x128xf32>
    %7 = vector.shape_cast %6 : vector<1x1x128xf32> to vector<1x128xf32>
    %c0_8 = arith.constant 0 : index
    %c0_9 = arith.constant 0 : index
    %c0_10 = arith.constant 0 : index
    %8 = vector.load %arg2[%c0_8, %c0_9, %c0_10] : memref<4x1x128xf32, #tpu.memory_space<vmem>>, vector<1x1x128xf32>
    %9 = vector.shape_cast %8 : vector<1x1x128xf32> to vector<1x128xf32>
    %c1_11 = arith.constant 1 : index
    %c0_12 = arith.constant 0 : index
    %c0_13 = arith.constant 0 : index
    %10 = vector.load %arg2[%c1_11, %c0_12, %c0_13] : memref<4x1x128xf32, #tpu.memory_space<vmem>>, vector<1x1x128xf32>
    %11 = vector.shape_cast %10 : vector<1x1x128xf32> to vector<1x128xf32>
    %c2_14 = arith.constant 2 : index
    %c0_15 = arith.constant 0 : index
    %c0_16 = arith.constant 0 : index
    %12 = vector.load %arg2[%c2_14, %c0_15, %c0_16] : memref<4x1x128xf32, #tpu.memory_space<vmem>>, vector<1x1x128xf32>
    %13 = vector.shape_cast %12 : vector<1x1x128xf32> to vector<1x128xf32>
    %c3_17 = arith.constant 3 : index
    %c0_18 = arith.constant 0 : index
    %c0_19 = arith.constant 0 : index
    %14 = vector.load %arg2[%c3_17, %c0_18, %c0_19] : memref<4x1x128xf32, #tpu.memory_space<vmem>>, vector<1x1x128xf32>
    %15 = vector.shape_cast %14 : vector<1x1x128xf32> to vector<1x128xf32>
    %16 = arith.maximumf %1, %9 : vector<1x128xf32>
    %17 = arith.maximumf %3, %11 : vector<1x128xf32>
    %18 = arith.minimumf %5, %13 : vector<1x128xf32>
    %19 = arith.minimumf %7, %15 : vector<1x128xf32>
    %20 = arith.subf %18, %16 : vector<1x128xf32>
    %21 = math.absf %20 : vector<1x128xf32>
    %22 = arith.subf %19, %17 : vector<1x128xf32>
    %23 = math.absf %22 : vector<1x128xf32>
    %24 = arith.mulf %21, %23 : vector<1x128xf32>
    %25 = arith.subf %5, %1 : vector<1x128xf32>
    %26 = arith.subf %7, %3 : vector<1x128xf32>
    %27 = arith.mulf %25, %26 : vector<1x128xf32>
    %28 = arith.subf %13, %9 : vector<1x128xf32>
    %29 = arith.subf %15, %11 : vector<1x128xf32>
    %30 = arith.mulf %28, %29 : vector<1x128xf32>
    %31 = arith.addf %27, %30 : vector<1x128xf32>
    %32 = arith.subf %31, %24 : vector<1x128xf32>
    %cst = arith.constant 9.99999997E-7 : f32
    %33 = vector.broadcast %cst : f32 to vector<1x128xf32>
    %34 = arith.addf %32, %33 : vector<1x128xf32>
    %35 = arith.divf %24, %34 : vector<1x128xf32>
    %36 = arith.minimumf %1, %9 : vector<1x128xf32>
    %37 = arith.minimumf %3, %11 : vector<1x128xf32>
    %38 = arith.maximumf %5, %13 : vector<1x128xf32>
    %39 = arith.maximumf %7, %15 : vector<1x128xf32>
    %40 = arith.subf %38, %36 : vector<1x128xf32>
    %cst_20 = arith.constant 0.000000e+00 : f32
    %41 = vector.broadcast %cst_20 : f32 to vector<1x128xf32>
    %42 = arith.maximumf %40, %41 : vector<1x128xf32>
    %43 = arith.subf %39, %37 : vector<1x128xf32>
    %cst_21 = arith.constant 0.000000e+00 : f32
    %44 = vector.broadcast %cst_21 : f32 to vector<1x128xf32>
    %45 = arith.maximumf %43, %44 : vector<1x128xf32>
    %46 = arith.mulf %42, %45 : vector<1x128xf32>
    %cst_22 = arith.constant 9.99999997E-7 : f32
    %47 = vector.broadcast %cst_22 : f32 to vector<1x128xf32>
    %48 = arith.addf %46, %47 : vector<1x128xf32>
    %49 = arith.subf %48, %34 : vector<1x128xf32>
    %50 = arith.divf %49, %48 : vector<1x128xf32>
    %51 = arith.subf %35, %50 : vector<1x128xf32>
    %cst_23 = arith.constant 1.000000e+00 : f32
    %52 = vector.broadcast %cst_23 : f32 to vector<1x128xf32>
    %53 = arith.subf %52, %51 : vector<1x128xf32>
    %54 = tpu.iota {dimensions = array<i32: 0>} : vector<1x128xi32>
    %55 = tpu.iota {dimensions = array<i32: 1>} : vector<1x128xi32>
    %c1_i32 = arith.constant 1 : i32
    %56 = arith.muli %arg0, %c1_i32 : i32
    %57 = vector.broadcast %56 : i32 to vector<1x128xi32>
    %58 = arith.addi %57, %54 : vector<1x128xi32>
    %c128_i32 = arith.constant 128 : i32
    %59 = vector.broadcast %c128_i32 : i32 to vector<1x128xi32>
    %60 = arith.muli %58, %59 : vector<1x128xi32>
    %61 = arith.addi %60, %55 : vector<1x128xi32>
    %c8_i32 = arith.constant 8 : i32
    %62 = vector.broadcast %c8_i32 : i32 to vector<1x128xi32>
    %63 = arith.cmpi slt, %61, %62 : vector<1x128xi32>
    %cst_24 = arith.constant 0.000000e+00 : f32
    %64 = vector.broadcast %cst_24 : f32 to vector<1x128xf32>
    %65 = arith.select %63, %53, %64 : vector<1x128xi1>, vector<1x128xf32>
    %cst_25 = arith.constant dense<0.000000e+00> : vector<128xf32>
    %66 = vector.multi_reduction <add>, %65, %cst_25 [0] : vector<1x128xf32> to vector<128xf32>
    %67 = vector.shape_cast %66 : vector<128xf32> to vector<1x128xf32>
    %cst_26 = arith.constant 0.000000e+00 : f32
    %68 = vector.broadcast %cst_26 : f32 to vector<7x128xf32>
    %69 = tpu.concatenate %67, %68 in 0 : vector<1x128xf32>, vector<7x128xf32> -> vector<8x128xf32>
    %c0_27 = arith.constant 0 : index
    %c0_28 = arith.constant 0 : index
    %70 = vector.load %arg3[%c0_27, %c0_28] : memref<8x128xf32, #tpu.memory_space<vmem>>, vector<8x128xf32>
    tpu.vector_store %arg3[%c0_27, %c0_28], %69 {strides = array<i32>} : memref<8x128xf32, #tpu.memory_space<vmem>>, vector<8x128xf32>,
    return
  }
  func.func @transform_0(%arg0: i32) -> (i32, i32, i32) {
    %c0_i32 = arith.constant 0 : i32
    %c0_i32_0 = arith.constant 0 : i32
    %c0_i32_1 = arith.constant 0 : i32
    return %c0_i32, %arg0, %c0_i32_0 : i32, i32, i32
  }
  func.func @transform_1(%arg0: i32) -> (i32, i32, i32) {
    %c0_i32 = arith.constant 0 : i32
    %c0_i32_0 = arith.constant 0 : i32
    %c0_i32_1 = arith.constant 0 : i32
    return %c0_i32, %arg0, %c0_i32_0 : i32, i32, i32
  }
  func.func @transform_2(%arg0: i32) -> (i32, i32) {
    %c0_i32 = arith.constant 0 : i32
    %c0_i32_0 = arith.constant 0 : i32
    return %arg0, %c0_i32 : i32, i32
  }
}

</mosaic_0001>

<llo_original>
// kernel: tpu_custom_call.1
$region0: #{tpu_custom_call.1}
  #allocation0 [shape = 'u32[]', space=smem, size = 0x4, offset = 0x4, fixed_abs, tag = 'smem constant byte address 0x4 - core index']
  #allocation1 [shape = 'u32[144,128]{1,0:T(1,128)}', space=vmem, size = 0x12000, scoped, tag = 'internal scratch']
  %s0 = inlined_call_operand.hbm [shape: f32[4,1,128], index: 0, kind: input, shape index: {}]
  %s1 = inlined_call_operand.hbm [shape: f32[4,1,128], index: 1, kind: input, shape index: {}]
  %s2 = inlined_call_operand.hbm [shape: f32[8,128], index: 2, kind: output, shape index: {}]
  %s3 = sld [smem:[#allocation0]]
  $region26: #{tpu_custom_call.1} parent=0
    _
  %s5 = ssub.s32 1, %s3
  %s6 = scalar_select 0, %s5, %s3
  $region1: #{tpu_custom_call.1} parent=0
    #allocation2 [shape = 'u8[2048]{0}', space=vmem, size = 0x800, scoped, tag = 'input window, operand 0, single buffered']
    #allocation3 [shape = 's32[1]{0}', space=sflag, size = 0x4, scoped, tag = 'scoped memory for tpu_custom_call.1']
    #allocation4 [shape = 's32[1]{0}', space=sflag, size = 0x4, scoped, tag = 'scoped memory for tpu_custom_call.1']
    #allocation5 [shape = 'u8[2048]{0}', space=vmem, size = 0x800, scoped, tag = 'input window, operand 1, single buffered']
    #allocation6 [shape = 's32[1]{0}', space=sflag, size = 0x4, scoped, tag = 'scoped memory for tpu_custom_call.1']
    #allocation7 [shape = 'u8[4096]{0}', space=vmem, size = 0x1000, scoped, tag = 'output window, operand 0, single buffered']
    %7 = vsyncpa [#allocation3], 0
    %8 = vsyncpa [#allocation6], 0
    %9 = vsyncpa [#allocation4], 0
    // Predicated region
    $region2: #{tpu_custom_call.1} parent=1 // pred_check
      _
    $region3: #{tpu_custom_call.1} parent=1 // pred_check_branch
      %11 = sbr.rel (0) target = $region5
    $region4: #{tpu_custom_call.1} parent=1 // pred_region
      %s13 = ssub.s32 64, 64
      %14 = vsyncadd [#allocation3], %s13
      %s15 = sshll.u32 [#allocation2], 4
      %s16 = int_to_ptr.vmem [resolvable:$true] %s15
      %21 = dma.hbm_to_vmem [thread:$0]  %s0, 64, %s16, [#allocation3], 16, 16, 1
    $region5: #{tpu_custom_call.1} parent=1 // pred_fallthru
      _
    // Predicated region
    $region6: #{tpu_custom_call.1} parent=1 // pred_check
      _
    $region7: #{tpu_custom_call.1} parent=1 // pred_check_branch
      %23 = sbr.rel (0) target = $region9
    $region8: #{tpu_custom_call.1} parent=1 // pred_region
      %s25 = ssub.s32 64, 64
      %26 = vsyncadd [#allocation6], %s25
      %s27 = sshll.u32 [#allocation5], 4
      %s28 = int_to_ptr.vmem [resolvable:$true] %s27
      %33 = dma.hbm_to_vmem [thread:$0]  %s1, 64, %s28, [#allocation6], 16, 16, 1
    $region9: #{tpu_custom_call.1} parent=1 // pred_fallthru
      _
    // Predicated region
    $region10: #{tpu_custom_call.1} parent=1 // pred_check
      _
    $region11: #{tpu_custom_call.1} parent=1 // pred_check_branch
      %35 = sbr.rel (0) target = $region13
    $region12: #{tpu_custom_call.1} parent=1 // pred_region
      %36 = dma.done [#allocation3], 64
    $region13: #{tpu_custom_call.1} parent=1 // pred_fallthru
      _
    // Predicated region
    $region14: #{tpu_custom_call.1} parent=1 // pred_check
      _
    $region15: #{tpu_custom_call.1} parent=1 // pred_check_branch
      %38 = sbr.rel (0) target = $region17
    $region16: #{tpu_custom_call.1} parent=1 // pred_region
      %39 = dma.done [#allocation6], 64
    $region17: #{tpu_custom_call.1} parent=1 // pred_fallthru
      _
    %v40 = vld [vmem:[#allocation2] sm:$0x1]
    %s41 = scalar_lea.vmem [#allocation2], 1
    %v42 = vld [vmem:[%s41] sm:$0x1]
    %s43 = scalar_lea.vmem [#allocation2], 2
    %v44 = vld [vmem:[%s43] sm:$0x1]
    %s45 = scalar_lea.vmem [#allocation2], 3
    %v46 = vld [vmem:[%s45] sm:$0x1]
    %v47 = vld [vmem:[#allocation5] sm:$0x1]
    %s48 = scalar_lea.vmem [#allocation5], 1
    %v49 = vld [vmem:[%s48] sm:$0x1]
    %s50 = scalar_lea.vmem [#allocation5], 2
    %v51 = vld [vmem:[%s50] sm:$0x1]
    %s52 = scalar_lea.vmem [#allocation5], 3
    %v53 = vld [vmem:[%s52] sm:$0x1]
    %v54 = vmax.f32 %v40, %v47
    %v55 = vmax.f32 %v42, %v49
    %v56 = vmin.f32 %v44, %v51
    %v57 = vmin.f32 %v46, %v53
    %v58 = vsub.f32 %v56, %v54
    %v59 = vand.u32 2147483647, %v58
    %v60 = vsub.f32 %v57, %v55
    %v61 = vand.u32 2147483647, %v60
    %v62 = vmul.f32 %v59, %v61
    %v63 = vsub.f32 %v44, %v40
    %v64 = vsub.f32 %v46, %v42
    %v65 = vmul.f32 %v63, %v64
    %v66 = vsub.f32 %v51, %v47
    %v67 = vsub.f32 %v53, %v49
    %v68 = vmul.f32 %v66, %v67
    %v69 = vadd.f32 %v65, %v68
    %v70 = vsub.f32 %v69, %v62
    %v71 = vadd.f32 %v70, 1e-06
    %v72 = vrcp.pop %v71
    %v73 = vmul.f32 %v62, %v72
    %v74 = vmin.f32 %v40, %v47
    %v75 = vmin.f32 %v42, %v49
    %v76 = vmax.f32 %v44, %v51
    %v77 = vmax.f32 %v46, %v53
    %v78 = vsub.f32 %v76, %v74
    %v79 = vmax.f32 %v78, 0.0
    %v80 = vsub.f32 %v77, %v75
    %v81 = vmax.f32 %v80, 0.0
    %v82 = vmul.f32 %v79, %v81
    %v83 = vadd.f32 %v82, 1e-06
    %v84 = vsub.f32 %v83, %v71
    %v85 = vrcp.pop %v83
    %v86 = vmul.f32 %v84, %v85
    %v87 = vsub.f32 %v73, %v86
    %v88 = vsub.f32 1.0, %v87
    %v89 = vlaneseq
    %v90 = vshrl.u32 %v89, 7
    %v91 = vlaneseq
    %v92 = vand.u32 %v91, 127
    %v93 = vstv 0
    %v94 = vadd.s32 %v93, %v90
    %v95 = vmul.u32 %v94, 128
    %v96 = vadd.s32 %v95, %v92
    %vm97 = vcmp.lt.s32.totalorder %v96, 8
    %v98 = vsel %vm97, %v88, 0.0
    %v99 = vadd.f32 %v98, 0.0
    %vm100 = vcmask 1040384
    %v101 = vsel %vm100, %v99, 0.0
    %102 = vst [vmem:[#allocation7] sm:$0xff] %v101
    // Predicated region
    $region18: #{tpu_custom_call.1} parent=1 // pred_check
      _
    $region19: #{tpu_custom_call.1} parent=1 // pred_check_branch
      %104 = sbr.rel (0) target = $region21
    $region20: #{tpu_custom_call.1} parent=1 // pred_region
      %s106 = ssub.s32 128, 128
      %107 = vsyncadd [#allocation4], %s106
      %s109 = sshll.u32 [#allocation7], 4
      %s110 = int_to_ptr.vmem [resolvable:$true] %s109
      %112 = dma.vmem_to_hbm [thread:$0]  %s110, 128, %s2, [#allocation4]
    $region21: #{tpu_custom_call.1} parent=1 // pred_fallthru
      _
    // Predicated region
    $region22: #{tpu_custom_call.1} parent=1 // pred_check
      _
    $region23: #{tpu_custom_call.1} parent=1 // pred_check_branch
      %114 = sbr.rel (0) target = $region25
    $region24: #{tpu_custom_call.1} parent=1 // pred_region
      %115 = dma.done [#allocation4], 128
    $region25: #{tpu_custom_call.1} parent=1 // pred_fallthru
      _
    %116 = vsyncpa [#allocation3], 1
    %117 = vsyncpa [#allocation6], 1
    %118 = vsyncpa [#allocation4], 1

</llo_original>
